<compile_context>
chip_gen: v7x
topology: tpu7x:2x2x1
jax: 0.10.0
libtpu: 0.0.40
codegen_flags: <defaults>
</compile_context>

<pallas_src>
import functools

import jax
import jax.numpy as jnp
from jax.experimental import pallas as pl
from jax.experimental.pallas import tpu as pltpu


def gst_embeddings_kernel(x_ref, w_ref, p_ref, o_ref, *, eps):
    # ---- Linear: y = x @ W + b  (MXU, native-dtype operands, f32 accumulation) ----
    y = jnp.dot(x_ref[...], w_ref[...], preferred_element_type=jnp.float32)  # [TM, H]

    params = p_ref[...].astype(jnp.float32)          # [3, H] = (bias, gamma, beta)
    bias = params[0:1, :]
    gamma = params[1:2, :]
    beta = params[2:3, :]
    y = y + bias                                     # broadcast [1, H]

    # ---- LayerNorm over the true hidden dim (biased variance, PyTorch semantics) ----
    # No lane masking needed: the block covers exactly H lanes.
    h = y.shape[-1]
    inv_h = jnp.float32(1.0 / h)
    mean = jnp.sum(y, axis=-1, keepdims=True) * inv_h
    centered = y - mean
    var = jnp.sum(centered * centered, axis=-1, keepdims=True) * inv_h
    inv = jax.lax.rsqrt(var + jnp.float32(eps))
    out = (centered * inv) * gamma + beta

    # ---- Dropout: identity in eval mode ----
    # TODO(synk): training-mode dropout (pltpu.prng_seed + pltpu.prng_random_bits).
    o_ref[...] = out.astype(o_ref.dtype)


def _round_up(x, m):
    return (x + m - 1) // m * m


def _choose_tile_m(m, tile_m_max):
    """Row-tile size: big enough to amortize the ~0.35us/step pipeline overhead,
    capped so grid_m >= 4 for large M (v7x megacore sharding + pipelining)."""
    m8 = _round_up(m, 8)
    if m8 <= 1024:
        # Small problem: one (or very few) blocks; launch-bound regardless.
        return max(8, min(m8, _round_up(tile_m_max, 8)))
    tm = min(tile_m_max, _round_up(pl.cdiv(m, 4), 8))
    return max(256, _round_up(tm, 8))


def gst_embeddings(input_vec, weight, bias, gamma, beta, *, eps=1e-12, tile_m_max=4096):
    """input_vec: [B, S, K]; weight: [K, H]; bias/gamma/beta: [H]."""
    B, S, K = input_vec.shape
    H = weight.shape[1]
    M = B * S

    TM = _choose_tile_m(M, tile_m_max)
    grid_m = pl.cdiv(M, TM)          # ragged last block handled by Pallas write masking

    x2d = input_vec.reshape(M, K)

    # Fuse bias/gamma/beta into a single [3, H] parameter slab (one DMA).
    params = jnp.stack([bias, gamma, beta], axis=0)

    kernel = functools.partial(gst_embeddings_kernel, eps=eps)

    out2d = pl.pallas_call(
        kernel,
        out_shape=jax.ShapeDtypeStruct((M, H), input_vec.dtype),
        grid_spec=pltpu.PrefetchScalarGridSpec(
            num_scalar_prefetch=0,
            grid=(grid_m,),
            in_specs=[
                pl.BlockSpec((TM, K), lambda i: (i, 0)),   # activations: tiled over M
                pl.BlockSpec((K, H), lambda i: (0, 0)),    # weight: VMEM-resident
                pl.BlockSpec((3, H), lambda i: (0, 0)),    # fused bias/gamma/beta
            ],
            out_specs=pl.BlockSpec((TM, H), lambda i: (i, 0)),
        ),
        compiler_params=pltpu.CompilerParams(
            dimension_semantics=("parallel",),   # shard M across TCs on v7x
        ),
    )(x2d, weight, params)

    return out2d.reshape(B, S, H)


def _reference(input_vec, weight, bias, gamma, beta, eps=1e-12):
    y = jnp.einsum(
        "bsk,kh->bsh", input_vec.astype(jnp.float32), weight.astype(jnp.float32)
    ) + bias.astype(jnp.float32)
    mean = jnp.mean(y, axis=-1, keepdims=True)
    var = jnp.mean((y - mean) ** 2, axis=-1, keepdims=True)
    return ((y - mean) / jnp.sqrt(var + eps)) * gamma + beta


if __name__ == "__main__":
    # Small config consistent with GSTEmbeddings: input_size=16, hidden_size=32,
    # layer_norm_eps=1e-12, dropout (inference -> identity).
    input_size, hidden_size = 16, 32
    eps = 1e-12

    key = jax.random.PRNGKey(0)
    k_x, k_w, k_b, k_g, k_be, k_x2 = jax.random.split(key, 6)

    # Deterministic synthetic parameters (no checkpoint).
    weight = jax.random.normal(k_w, (input_size, hidden_size), dtype=jnp.float32) * 0.05
    bias = jax.random.normal(k_b, (hidden_size,), dtype=jnp.float32) * 0.01
    gamma = 1.0 + 0.1 * jax.random.normal(k_g, (hidden_size,), dtype=jnp.float32)
    beta = 0.1 * jax.random.normal(k_be, (hidden_size,), dtype=jnp.float32)

    ok = True

    # Case 1: shipped tiny config (single block, launch-bound).
    batch, seq = 2, 8
    input_vec = jax.random.normal(k_x, (batch, seq, input_size), dtype=jnp.float32)
    out = jax.block_until_ready(gst_embeddings(input_vec, weight, bias, gamma, beta, eps=eps))
    ref = _reference(input_vec, weight, bias, gamma, beta, eps=eps)
    ok &= out.shape == (batch, seq, hidden_size)
    ok &= bool(jnp.allclose(out, ref.astype(out.dtype), atol=1e-4, rtol=1e-4))

    # Case 2: multi-step grid with a ragged final block (M=600, forced TM=128).
    batch2, seq2 = 3, 200
    input_vec2 = jax.random.normal(k_x2, (batch2, seq2, input_size), dtype=jnp.float32)
    out2 = jax.block_until_ready(
        gst_embeddings(input_vec2, weight, bias, gamma, beta, eps=eps, tile_m_max=128)
    )
    ref2 = _reference(input_vec2, weight, bias, gamma, beta, eps=eps)
    ok &= out2.shape == (batch2, seq2, hidden_size)
    ok &= bool(jnp.allclose(out2, ref2.astype(out2.dtype), atol=1e-4, rtol=1e-4))

    assert ok
    print("KERNEL_OK")
</pallas_src>

<mosaic_0001>
module attributes {stable_mosaic.version = 11 : i64} {
  func.func @gst_embeddings_kernel(%arg0: i32, %arg1: memref<16x16xf32, #tpu.memory_space<vmem>>, %arg2: memref<16x32xf32, #tpu.memory_space<vmem>>, %arg3: memref<3x32xf32, #tpu.memory_space<vmem>>, %arg4: memref<16x32xf32, #tpu.memory_space<vmem>>) attributes {dimension_semantics = [#tpu.dimension_semantics<parallel>], iteration_bounds = array<i64: 1>, scalar_prefetch = 0 : i64, scratch_operands = 0 : i64, tpu.core_type = #tpu.core_type<tc>, window_params = [{transform_indices = @transform_0, window_bounds = array<i64: 16, 16>}, {pipeline_mode = #tpu.pipeline_mode<synchronous>, transform_indices = @transform_1, window_bounds = array<i64: 16, 32>}, {pipeline_mode = #tpu.pipeline_mode<synchronous>, transform_indices = @transform_2, window_bounds = array<i64: 3, 32>}, {transform_indices = @transform_3, window_bounds = array<i64: 16, 32>}]} {
    %c0 = arith.constant 0 : index
    %c0_0 = arith.constant 0 : index
    %0 = vector.load %arg1[%c0, %c0_0] : memref<16x16xf32, #tpu.memory_space<vmem>>, vector<16x16xf32>
    %c0_1 = arith.constant 0 : index
    %c0_2 = arith.constant 0 : index
    %1 = vector.load %arg2[%c0_1, %c0_2] : memref<16x32xf32, #tpu.memory_space<vmem>>, vector<16x32xf32>
    %cst = arith.constant dense<0.000000e+00> : vector<16x32xf32>
    %2 = tpu.matmul %0, %1, %cst {dimension_numbers = #tpu.dot_dimension_numbers<[1], [0], [0], [1], [0, 0, 1, 1], [], []>} : vector<16x16xf32>, vector<16x32xf32>, vector<16x32xf32> -> vector<16x32xf32>
    %c0_3 = arith.constant 0 : index
    %c0_4 = arith.constant 0 : index
    %3 = vector.load %arg3[%c0_3, %c0_4] : memref<3x32xf32, #tpu.memory_space<vmem>>, vector<3x32xf32>
    %4 = vector.extract_strided_slice %3 {offsets = [0, 0], sizes = [1, 32], strides = [1, 1]} : vector<3x32xf32> to vector<1x32xf32>
    %5 = vector.extract_strided_slice %3 {offsets = [1, 0], sizes = [1, 32], strides = [1, 1]} : vector<3x32xf32> to vector<1x32xf32>
    %6 = vector.extract_strided_slice %3 {offsets = [2, 0], sizes = [1, 32], strides = [1, 1]} : vector<3x32xf32> to vector<1x32xf32>
    %7 = vector.broadcast %4 : vector<1x32xf32> to vector<16x32xf32>
    %8 = arith.addf %2, %7 : vector<16x32xf32>
    %cst_5 = arith.constant dense<0.000000e+00> : vector<16xf32>
    %9 = vector.multi_reduction <add>, %8, %cst_5 [1] : vector<16x32xf32> to vector<16xf32>
    %10 = vector.shape_cast %9 : vector<16xf32> to vector<16x1xf32>
    %cst_6 = arith.constant 3.125000e-02 : f32
    %11 = vector.broadcast %cst_6 : f32 to vector<16x1xf32>
    %12 = arith.mulf %10, %11 : vector<16x1xf32>
    %13 = vector.broadcast %12 : vector<16x1xf32> to vector<16x32xf32>
    %14 = arith.subf %8, %13 : vector<16x32xf32>
    %15 = arith.mulf %14, %14 : vector<16x32xf32>
    %cst_7 = arith.constant dense<0.000000e+00> : vector<16xf32>
    %16 = vector.multi_reduction <add>, %15, %cst_7 [1] : vector<16x32xf32> to vector<16xf32>
    %17 = vector.shape_cast %16 : vector<16xf32> to vector<16x1xf32>
    %cst_8 = arith.constant 3.125000e-02 : f32
    %18 = vector.broadcast %cst_8 : f32 to vector<16x1xf32>
    %19 = arith.mulf %17, %18 : vector<16x1xf32>
    %cst_9 = arith.constant 9.99999996E-13 : f32
    %20 = vector.broadcast %cst_9 : f32 to vector<16x1xf32>
    %21 = arith.addf %19, %20 : vector<16x1xf32>
    %22 = math.rsqrt %21 : vector<16x1xf32>
    %23 = vector.broadcast %22 : vector<16x1xf32> to vector<16x32xf32>
    %24 = arith.mulf %14, %23 : vector<16x32xf32>
    %25 = vector.broadcast %5 : vector<1x32xf32> to vector<16x32xf32>
    %26 = arith.mulf %24, %25 : vector<16x32xf32>
    %27 = vector.broadcast %6 : vector<1x32xf32> to vector<16x32xf32>
    %28 = arith.addf %26, %27 : vector<16x32xf32>
    %c0_10 = arith.constant 0 : index
    %c0_11 = arith.constant 0 : index
    %29 = vector.load %arg4[%c0_10, %c0_11] : memref<16x32xf32, #tpu.memory_space<vmem>>, vector<16x32xf32>
    tpu.vector_store %arg4[%c0_10, %c0_11], %28 {strides = array<i32>} : memref<16x32xf32, #tpu.memory_space<vmem>>, vector<16x32xf32>,
    return
  }
  func.func @transform_0(%arg0: i32) -> (i32, i32) {
    %c0_i32 = arith.constant 0 : i32
    %c0_i32_0 = arith.constant 0 : i32
    return %arg0, %c0_i32 : i32, i32
  }
  func.func @transform_1(%arg0: i32) -> (i32, i32) {
    %c0_i32 = arith.constant 0 : i32
    %c0_i32_0 = arith.constant 0 : i32
    %c0_i32_1 = arith.constant 0 : i32
    return %c0_i32, %c0_i32_0 : i32, i32
  }
  func.func @transform_2(%arg0: i32) -> (i32, i32) {
    %c0_i32 = arith.constant 0 : i32
    %c0_i32_0 = arith.constant 0 : i32
    %c0_i32_1 = arith.constant 0 : i32
    return %c0_i32, %c0_i32_0 : i32, i32
  }
  func.func @transform_3(%arg0: i32) -> (i32, i32) {
    %c0_i32 = arith.constant 0 : i32
    %c0_i32_0 = arith.constant 0 : i32
    return %arg0, %c0_i32 : i32, i32
  }
}

</mosaic_0001>

<llo_original>
// kernel: tpu_custom_call.1
$region0: #{tpu_custom_call.1}
  #allocation0 [shape = 'u32[]', space=smem, size = 0x4, offset = 0x4, fixed_abs, tag = 'smem constant byte address 0x4 - core index']
  #allocation1 [shape = 'u32[144,128]{1,0:T(1,128)}', space=vmem, size = 0x12000, scoped, tag = 'internal scratch']
  %s0 = inlined_call_operand.hbm [shape: f32[16,16], index: 0, kind: input, shape index: {}]
  %s1 = inlined_call_operand.hbm [shape: f32[16,32], index: 1, kind: input, shape index: {}]
  %s2 = inlined_call_operand.vmem [shape: f32[3,32], index: 2, kind: input, shape index: {}]
  %s3 = inlined_call_operand.hbm [shape: f32[16,32], index: 3, kind: output, shape index: {}]
  %s4 = sld [smem:[#allocation0]]
  $region30: #{tpu_custom_call.1} parent=0
    _
  %s6 = ssub.s32 1, %s4
  %s7 = scalar_select 0, %s6, %s4
  $region1: #{tpu_custom_call.1} parent=0
    #allocation2 [shape = 'u8[8192]{0}', space=vmem, size = 0x2000, scoped, tag = 'input window, operand 0, single buffered']
    #allocation3 [shape = 's32[1]{0}', space=sflag, size = 0x4, scoped, tag = 'scoped memory for tpu_custom_call.1']
    #allocation4 [shape = 's32[1]{0}', space=sflag, size = 0x4, scoped, tag = 'scoped memory for tpu_custom_call.1']
    #allocation5 [shape = 'u8[8192]{0}', space=vmem, size = 0x2000, scoped, tag = 'input window, operand 1, single buffered']
    #allocation6 [shape = 's32[1]{0}', space=sflag, size = 0x4, scoped, tag = 'scoped memory for tpu_custom_call.1']
    #allocation7 [shape = 'u8[8192]{0}', space=vmem, size = 0x2000, scoped, tag = 'output window, operand 0, single buffered']
    %8 = vsyncpa [#allocation3], 0
    %9 = vsyncpa [#allocation6], 0
    %10 = vsyncpa [#allocation4], 0
    // Predicated region
    $region2: #{tpu_custom_call.1} parent=1 // pred_check
      _
    $region3: #{tpu_custom_call.1} parent=1 // pred_check_branch
      %12 = sbr.rel (0) target = $region5
    $region4: #{tpu_custom_call.1} parent=1 // pred_region
      %s14 = ssub.s32 256, 256
      %15 = vsyncadd [#allocation3], %s14
      %s16 = sshll.u32 [#allocation2], 4
      %s17 = int_to_ptr.vmem [resolvable:$true] %s16
      %22 = dma.hbm_to_vmem [thread:$0]  %s0, 256, %s17, [#allocation3], 128, 128, 8
    $region5: #{tpu_custom_call.1} parent=1 // pred_fallthru
      _
    // Predicated region
    $region6: #{tpu_custom_call.1} parent=1 // pred_check
      _
    $region7: #{tpu_custom_call.1} parent=1 // pred_check_branch
      %24 = sbr.rel (0) target = $region9
    $region8: #{tpu_custom_call.1} parent=1 // pred_region
      %s26 = ssub.s32 256, 256
      %27 = vsyncadd [#allocation6], %s26
      %s28 = sshll.u32 [#allocation5], 4
      %s29 = int_to_ptr.vmem [resolvable:$true] %s28
      %34 = dma.hbm_to_vmem [thread:$0]  %s1, 256, %s29, [#allocation6], 128, 128, 8
    $region9: #{tpu_custom_call.1} parent=1 // pred_fallthru
      _
    // Predicated region
    $region10: #{tpu_custom_call.1} parent=1 // pred_check
      _
    $region11: #{tpu_custom_call.1} parent=1 // pred_check_branch
      %36 = sbr.rel (0) target = $region13
    $region12: #{tpu_custom_call.1} parent=1 // pred_region
      _
    $region13: #{tpu_custom_call.1} parent=1 // pred_fallthru
      _
    // Predicated region
    $region14: #{tpu_custom_call.1} parent=1 // pred_check
      _
    $region15: #{tpu_custom_call.1} parent=1 // pred_check_branch
      %38 = sbr.rel (0) target = $region17
    $region16: #{tpu_custom_call.1} parent=1 // pred_region
      %39 = dma.done [#allocation3], 256
    $region17: #{tpu_custom_call.1} parent=1 // pred_fallthru
      _
    // Predicated region
    $region18: #{tpu_custom_call.1} parent=1 // pred_check
      _
    $region19: #{tpu_custom_call.1} parent=1 // pred_check_branch
      %41 = sbr.rel (0) target = $region21
    $region20: #{tpu_custom_call.1} parent=1 // pred_region
      %42 = dma.done [#allocation6], 256
    $region21: #{tpu_custom_call.1} parent=1 // pred_fallthru
      _
    %v43 = vld [vmem:[#allocation2] sm:$0xff]
    %v44 = vld [vmem:[#allocation2 + $0x8] sm:$0xff]
    %v45 = vld [vmem:[#allocation5] sm:$0xff]
    %v46 = vld [vmem:[#allocation5 + $0x8] sm:$0xff]
    %v47 = vld [vmem:[%s2] sm:$0x7]
    %v48 = vlaneseq
    %v49 = vshrl.u32 %v48, 7
    %v50 = vsub.s32 0, %v49
    %v51 = vrot.slane %v47, %v50
    %vm52 = vcmask 130048
    %v54 = vsel %vm52, %v43, 0
    %v57 = vsel %vm52, %v44, 0
    %59 = vmatprep.subr.mxu0 0.0
    %60 = vmatpush1.msra.mxu0 %v45
    %61 = vmatprep.subr.mxu0 0.0
    %62 = vmatpush1.msra.mxu0 %v46
    %63 = vmatprep.subr.mxu0 0.0
    %64 = vmatpush1.msra.mxu0 0.0
    %65 = vmatprep.subr.mxu0 0.0
    %66 = vmatpush1.msra.mxu0 0.0
    %67 = vmatprep.subr.mxu0 0.0
    %68 = vmatpush1.msra.mxu0 0.0
    %69 = vmatprep.subr.mxu0 0.0
    %70 = vmatpush1.msra.mxu0 0.0
    %71 = vmatprep.subr.mxu0 0.0
    %72 = vmatpush1.msra.mxu0 0.0
    %73 = vmatprep.subr.mxu0 0.0
    %74 = vmatpush1.msra.mxu0 0.0
    %75 = vmatprep.subr.mxu0 0.0
    %76 = vmatpush1.msra.mxu0 0.0
    %77 = vmatprep.subr.mxu0 0.0
    %78 = vmatpush1.msra.mxu0 0.0
    %79 = vmatprep.subr.mxu0 0.0
    %80 = vmatpush1.msra.mxu0 0.0
    %81 = vmatprep.subr.mxu0 0.0
    %82 = vmatpush1.msra.mxu0 0.0
    %83 = vmatprep.subr.mxu0 0.0
    %84 = vmatpush1.msra.mxu0 0.0
    %85 = vmatprep.subr.mxu0 0.0
    %86 = vmatpush1.msra.mxu0 0.0
    %87 = vmatprep.subr.mxu0 0.0
    %88 = vmatpush1.msra.mxu0 0.0
    %89 = vmatprep.subr.mxu0 0.0
    %90 = vmatpush1.msra.mxu0 0.0
    %91 = vmatprep.subr.mxu0 0.0
    %92 = vmatpush1.msra.mxu0 0.0
    %93 = vmatprep.subr.mxu0 0.0
    %94 = vmatpush1.msra.mxu0 0.0
    %95 = vmatprep.subr.mxu0 0.0
    %96 = vmatpush1.msra.mxu0 0.0
    %97 = vmatprep.subr.mxu0 0.0
    %98 = vmatpush1.msra.mxu0 0.0
    %99 = vmatprep.subr.mxu0 0.0
    %100 = vmatpush1.msra.mxu0 0.0
    %101 = vmatprep.subr.mxu0 0.0
    %102 = vmatpush1.msra.mxu0 0.0
    %103 = vmatprep.subr.mxu0 0.0
    %104 = vmatpush1.msra.mxu0 0.0
    %105 = vmatprep.subr.mxu0 0.0
    %106 = vmatpush1.msra.mxu0 0.0
    %107 = vmatprep.subr.mxu0 0.0
    %108 = vmatpush1.msra.mxu0 0.0
    %109 = vmatprep.subr.mxu0 0.0
    %110 = vmatpush1.msra.mxu0 0.0
    %111 = vmatprep.subr.mxu0 0.0
    %112 = vmatpush1.msra.mxu0 0.0
    %113 = vmatprep.subr.mxu0 0.0
    %114 = vmatpush1.msra.mxu0 0.0
    %115 = vmatprep.subr.mxu0 0.0
    %116 = vmatpush1.msra.mxu0 0.0
    %117 = vmatprep.subr.mxu0 0.0
    %118 = vmatpush1.msra.mxu0 0.0
    %119 = vmatprep.subr.mxu0 0.0
    %120 = vmatpush1.msra.mxu0 0.0
    %121 = vmatprep.subr.mxu0 0.0
    %122 = vmatpush1.msra.mxu0 0.0
    %123 = vmatprep.mubr.f32.mxu0 0.0
    %124 = vmatmul.mubr.f32.gmra.mrb[0].mxu0 %v54
    %v125 = vpop.f32.mrb[0].mxu0
    %v126 = vadd.f32 %v51, %v125
    %v127 = vpop.f32.mrb[0].mxu0
    %128 = vmatprep.mubr.f32.mxu0 0.0
    %129 = vmatmul.mubr.f32.gmra.mrb[0].mxu0 %v57
    %v130 = vpop.f32.mrb[0].mxu0
    %v131 = vadd.f32 %v51, %v130
    %v132 = vpop.f32.mrb[0].mxu0
    %133 = vdwg.mxu0
    %vm134 = vcmask 261120
    %v135 = vsel %vm134, %v126, 0.0
    %136 = vadd.xlane.f32.xlu0 %v135
    %v137 = vpop.xlane.xlu0 %136
    %v138 = vsel %vm134, %v131, 0.0
    %139 = vadd.xlane.f32.xlu0 %v138
    %v140 = vpop.xlane.xlu0 %139
    %v141 = vmul.f32 %v137, 0.03125
    %v142 = vmul.f32 %v140, 0.03125
    %v143 = vsub.f32 %v126, %v141
    %v144 = vsub.f32 %v131, %v142
    %v145 = vmul.f32 %v143, %v143
    %v146 = vmul.f32 %v144, %v144
    %v147 = vsel %vm134, %v145, 0.0
    %148 = vadd.xlane.f32.xlu0 %v147
    %v149 = vpop.xlane.xlu0 %148
    %v150 = vsel %vm134, %v146, 0.0
    %151 = vadd.xlane.f32.xlu0 %v150
    %v152 = vpop.xlane.xlu0 %151
    %v153 = vmul.f32 %v149, 0.03125
    %v154 = vmul.f32 %v152, 0.03125
    %v155 = vadd.f32 %v153, 1e-12
    %v156 = vadd.f32 %v154, 1e-12
    %v157 = vrsqrt.pop %v155
    %v158 = vrsqrt.pop %v156
    %v159 = vmul.f32 %v143, %v157
    %v160 = vmul.f32 %v144, %v158
    %v161 = vlaneseq
    %v162 = vshrl.u32 %v161, 7
    %v163 = vsub.s32 1, %v162
    %v164 = vrot.slane %v47, %v163
    %v165 = vmul.f32 %v159, %v164
    %v166 = vmul.f32 %v160, %v164
    %v167 = vlaneseq
    %v168 = vshrl.u32 %v167, 7
    %v169 = vsub.s32 2, %v168
    %v170 = vrot.slane %v47, %v169
    %v171 = vadd.f32 %v165, %v170
    %v172 = vadd.f32 %v166, %v170
    %173 = vst.msk [vmem:[#allocation7] sm:$0xff] %vm134, %v171
    %174 = vst.msk [vmem:[#allocation7 + $0x8] sm:$0xff] %vm134, %v172
    // Predicated region
    $region22: #{tpu_custom_call.1} parent=1 // pred_check
      _
    $region23: #{tpu_custom_call.1} parent=1 // pred_check_branch
      %176 = sbr.rel (0) target = $region25
    $region24: #{tpu_custom_call.1} parent=1 // pred_region
      %s178 = ssub.s32 256, 256
      %179 = vsyncadd [#allocation4], %s178
      %s180 = sshll.u32 [#allocation7], 4
      %s181 = int_to_ptr.vmem [resolvable:$true] %s180
      %186 = dma.vmem_to_hbm [thread:$0]  %s181, 256, %s3, [#allocation4], 128, 128, 8
    $region25: #{tpu_custom_call.1} parent=1 // pred_fallthru
      _
    // Predicated region
    $region26: #{tpu_custom_call.1} parent=1 // pred_check
      _
    $region27: #{tpu_custom_call.1} parent=1 // pred_check_branch
      %188 = sbr.rel (0) target = $region29
    $region28: #{tpu_custom_call.1} parent=1 // pred_region
      %189 = dma.done [#allocation4], 256
    $region29: #{tpu_custom_call.1} parent=1 // pred_fallthru
      _
    %190 = vsyncpa [#allocation3], 1
    %191 = vsyncpa [#allocation6], 1
    %192 = vsyncpa [#allocation4], 1

</llo_original>
